<compile_context>
chip_gen: v6e
topology: v6e:2x2x1
jax: 0.10.0
libtpu: 0.0.40
codegen_flags: <defaults>
</compile_context>

<pallas_src>
import jax
import jax.numpy as jnp
from jax.experimental import pallas as pl
from jax.experimental.pallas import tpu as pltpu


def _squeeze_copy_kernel(a_ref, o_ref):
    # Single-element identity copy on the SMEM scalar (sld/sst) path.
    # squeeze has no arithmetic; this is the only data movement required.
    o_ref[0] = a_ref[0]


def squeeze_all_unit_dims(a: jax.Array) -> jax.Array:
    """Pallas equivalent of torch.squeeze(a) for an all-unit-dim f32 input.

    Matches the PyTorch module spec ([1, 1] float32 -> 0-d scalar tensor).
    Any input whose dims are all 1 is accepted; the result is a 0-d array.
    """
    assert all(d == 1 for d in a.shape), (
        f"expected all-unit-dim input (e.g. (1, 1)), got {a.shape}"
    )
    # SMEM is 32-bit scalar memory; keep the f32 contract explicit.
    assert a.dtype == jnp.float32, f"expected float32, got {a.dtype}"

    # Canonicalize to a flat (1,) array — metadata only (no data movement).
    a1 = jnp.reshape(a, (1,))

    copied = pl.pallas_call(
        _squeeze_copy_kernel,
        out_shape=jax.ShapeDtypeStruct((1,), a.dtype),
        # Gridless whole-array call; the scalar lives in SMEM on both sides.
        in_specs=[pl.BlockSpec(memory_space=pltpu.MemorySpace.SMEM)],
        out_specs=pl.BlockSpec(memory_space=pltpu.MemorySpace.SMEM),
        # Let the output reuse the input buffer when it is donatable.
        input_output_aliases={0: 0},
        # Tell XLA this is an 8-byte, 0-FLOP op so it schedules around it.
        cost_estimate=pl.CostEstimate(
            flops=0, transcendentals=0, bytes_accessed=8
        ),
    )(a1)

    # Rank reduction (squeeze of all unit dims) — metadata only.
    return jnp.reshape(copied, ())


if __name__ == "__main__":
    key = jax.random.PRNGKey(0)
    a = jax.random.normal(key, (1, 1), dtype=jnp.float32)
    expected = float(a[0, 0])

    # Amortize dispatch: run the forward inside jit (the intended usage).
    fwd = jax.jit(squeeze_all_unit_dims)
    out = jax.block_until_ready(fwd(a))

    # Sanity checks against the PyTorch semantics: 0-d result, same value.
    assert out.shape == (), f"expected 0-d output, got shape {out.shape}"
    assert out.dtype == jnp.float32
    assert abs(float(out) - expected) < 1e-6, "value mismatch"

    print("KERNEL_OK")
</pallas_src>

<mosaic_0001>
module attributes {stable_mosaic.version = 11 : i64} {
  func.func @_squeeze_copy_kernel(%arg0: memref<1xf32, #tpu.memory_space<smem>>, %arg1: memref<1xf32, #tpu.memory_space<smem>>) attributes {dimension_semantics = [], scalar_prefetch = 0 : i64, scratch_operands = 0 : i64, tpu.core_type = #tpu.core_type<tc>} {
    %c0 = arith.constant 0 : index
    %0 = memref.load %arg0[%c0] : memref<1xf32, #tpu.memory_space<smem>>
    %c0_0 = arith.constant 0 : index
    %1 = memref.load %arg1[%c0_0] : memref<1xf32, #tpu.memory_space<smem>>
    memref.store %0, %arg1[%c0_0] : memref<1xf32, #tpu.memory_space<smem>>
    return
  }
}

</mosaic_0001>

<llo_original>
// kernel: squeeze_all_unit_dims.1
$region0: #{squeeze_all_unit_dims.1}
  #allocation0 [shape = 'u32[]', space=smem, size = 0x4, offset = 0x4, fixed_abs, tag = 'smem constant byte address 0x4 - core index']
  #allocation1 [shape = 'u32[144,128]{1,0:T(1,128)}', space=vmem, size = 0x12000, scoped, tag = 'internal scratch']
  #allocation2 [shape = 'f32[1]{0:T(128)S(6)}', space=smem, size = 0x200, scoped, tag = 'scoped memory for squeeze_all_unit_dims.1']
  %s0 = inlined_call_operand.<no memory space> [shape: f32[1], index: 0, kind: input, shape index: {}, may-alias: {0,1}]
  %s1 = inlined_call_operand.hbm [shape: f32[1], index: 1, kind: output, shape index: {}, may-alias: {0,1}]
  %s2 = sld [smem:[#allocation0]]
  $region14: #{squeeze_all_unit_dims.1} parent=0
    _
  %s4 = ssub.s32 1, %s2
  %s5 = scalar_select 0, %s4, %s2
  %6 = sst [smem:[#allocation2]] %s0
  $region1: #{squeeze_all_unit_dims.1} parent=0
    #allocation3 [shape = 'u8[512]{0}', space=smem, size = 0x200, scoped, tag = 'output window, operand 0, single buffered']
    #allocation4 [shape = 's32[1]{0}', space=sflag, size = 0x4, scoped, tag = 'scoped memory for squeeze_all_unit_dims.1']
    %7 = vsyncpa [#allocation4], 0
    // Predicated region
    $region2: #{squeeze_all_unit_dims.1} parent=1 // pred_check
      _
    $region3: #{squeeze_all_unit_dims.1} parent=1 // pred_check_branch
      %9 = sbr.rel (0) target = $region5
    $region4: #{squeeze_all_unit_dims.1} parent=1 // pred_region
      _
    $region5: #{squeeze_all_unit_dims.1} parent=1 // pred_fallthru
      _
    %s10 = sld [smem:[#allocation2]]
    %s11 = scalar_lea.smem [#allocation3], 0
    %12 = sst [smem:[%s11]] %s10
    // Predicated region
    $region6: #{squeeze_all_unit_dims.1} parent=1 // pred_check
      _
    $region7: #{squeeze_all_unit_dims.1} parent=1 // pred_check_branch
      %14 = sbr.rel (0) target = $region9
    $region8: #{squeeze_all_unit_dims.1} parent=1 // pred_region
      %s16 = ssub.s32 16, 16
      %17 = vsyncadd [#allocation4], %s16
      %20 = dma.smem_to_hbm [#allocation3], 16, %s1, [#allocation4]
    $region9: #{squeeze_all_unit_dims.1} parent=1 // pred_fallthru
      _
    // Predicated region
    $region10: #{squeeze_all_unit_dims.1} parent=1 // pred_check
      _
    $region11: #{squeeze_all_unit_dims.1} parent=1 // pred_check_branch
      %22 = sbr.rel (0) target = $region13
    $region12: #{squeeze_all_unit_dims.1} parent=1 // pred_region
      %23 = dma.done [#allocation4], 16
    $region13: #{squeeze_all_unit_dims.1} parent=1 // pred_fallthru
      _
    %24 = sfence
    %25 = vsyncpa [#allocation4], 1

</llo_original>
